<compile_context>
chip_gen: v6e
topology: v6e:2x2x1
jax: 0.10.0
libtpu: 0.0.40
codegen_flags: <defaults>
</compile_context>

<pallas_src>
import jax
import jax.numpy as jnp
from jax.experimental import pallas as pl
from jax.experimental.pallas import tpu as pltpu

BN_EPS = 1e-5


def _lr_kernel(x_ref, w_ref, b_ref, o_ref):
    # One MXU matmul per batch tile: (TILE_N, D) @ (D, C) with f32 accumulation, + (1, C) bias.
    o_ref[...] = (
        jnp.dot(x_ref[...], w_ref[...], preferred_element_type=jnp.float32)
        + b_ref[...]
    ).astype(o_ref.dtype)


def _round_up(x, m):
    return (x + m - 1) // m * m


def logistic_regression_forward(x, gamma, beta, running_mean, running_var,
                                weight, bias, *, tile_n=1024):
    """Eval-mode forward: Linear(BatchNorm1d(x)).

    x: (N, D); weight: (C, D) as in nn.Linear; bias: (C,). Returns (N, C) f32 logits.
    """
    N, D = x.shape
    C = weight.shape[0]

    # ---- Fold eval-mode BatchNorm into the Linear parameters (exact algebra, in f32) ----
    # y = ((x - mean) * inv_std * gamma + beta) @ W^T + b
    #   = x @ [ (inv_std*gamma)[:, None] * W^T ]  +  [ b + (beta - mean*inv_std*gamma) @ W^T ]
    f32 = jnp.float32
    scale = gamma.astype(f32) * jax.lax.rsqrt(running_var.astype(f32) + BN_EPS)       # (D,)
    wT = weight.T.astype(f32)                                                         # (D, C)
    w_folded = scale[:, None] * wT                                                    # (D, C)
    b_folded = bias.astype(f32) + (beta.astype(f32) - running_mean.astype(f32) * scale) @ wT  # (C,)

    # Match x's dtype for the MXU operand (bf16 x -> bf16 weight halves the dominant traffic);
    # do NOT cast x here — a wrapper cast of x would be its own extra HBM pass.
    w_in = w_folded.astype(x.dtype)                                                   # (D, C)
    b_in = b_folded.reshape(1, C).astype(f32)                                         # (1, C)

    # ---- Batch tiling: large tiles amortize per-step overhead; cap so the grid has ----
    # ---- >=2 steps (when N allows) so both v7x TensorCores get work.               ----
    TILE_N = max(8, min(tile_n, _round_up(pl.cdiv(N, 2), 8)))
    grid_n = pl.cdiv(N, TILE_N)

    # Explicit VMEM budget: double-buffered x/out tiles + single-buffered weight/bias,
    # with 2x slack + 4 MiB headroom, clamped well under v7x's 64 MiB physical VMEM.
    x_tile_bytes = TILE_N * D * x.dtype.itemsize
    o_tile_bytes = TILE_N * C * 4
    w_bytes = D * C * w_in.dtype.itemsize
    vmem_limit = int(min(2 * (2 * x_tile_bytes + 2 * o_tile_bytes + w_bytes + C * 4)
                         + (4 << 20), 64 << 20))

    # TODO(synk): if num_classes grows to hundreds/thousands, add a second "parallel" grid
    #             axis over C and tile the weight's columns instead of holding (D, C) resident.
    out = pl.pallas_call(
        _lr_kernel,
        out_shape=jax.ShapeDtypeStruct((N, C), jnp.float32),
        grid=(grid_n,),
        in_specs=[
            # x tile: last block dim equals full array dim D -> no padding needed in HBM.
            pl.BlockSpec((TILE_N, D), lambda i: (i, 0)),
            # Folded weight/bias: grid-invariant -> single-buffered (no wasted VMEM).
            pl.BlockSpec((D, C), lambda i: (0, 0), pipeline_mode=pl.Buffered(1)),
            pl.BlockSpec((1, C), lambda i: (0, 0), pipeline_mode=pl.Buffered(1)),
        ],
        out_specs=pl.BlockSpec((TILE_N, C), lambda i: (i, 0)),
        compiler_params=pltpu.CompilerParams(
            dimension_semantics=("parallel",),   # batch axis: shard across TCs on v7x
            vmem_limit_bytes=vmem_limit,
        ),
    )(x, w_in, b_in)

    return out


def _reference(x, gamma, beta, running_mean, running_var, weight, bias):
    x_norm = (x - running_mean) * jax.lax.rsqrt(running_var + BN_EPS) * gamma + beta
    return x_norm @ weight.T + bias


if __name__ == "__main__":
    # Small, deterministic example consistent with the module:
    # input_dim = 32, num_classes = 8, batch = 8.
    D, C = 32, 8
    key = jax.random.PRNGKey(0)
    kx, kw, kb, kx2 = jax.random.split(key, 4)

    # Parameter init mirroring nn.BatchNorm1d / nn.Linear defaults (deterministic).
    gamma = jnp.ones((D,), jnp.float32)
    beta = jnp.zeros((D,), jnp.float32)
    running_mean = jnp.zeros((D,), jnp.float32)
    running_var = jnp.ones((D,), jnp.float32)
    bound = 1.0 / jnp.sqrt(D)
    weight = jax.random.uniform(kw, (C, D), jnp.float32, -bound, bound)
    bias = jax.random.uniform(kb, (C,), jnp.float32, -bound, bound)

    # --- Test 1: small batch (single grid step) ---
    N1 = 8
    x1 = jax.random.normal(kx, (N1, D), dtype=jnp.float32)
    out1 = jax.block_until_ready(
        logistic_regression_forward(x1, gamma, beta, running_mean, running_var, weight, bias)
    )
    ref1 = _reference(x1, gamma, beta, running_mean, running_var, weight, bias)
    assert out1.shape == (N1, C)
    assert jnp.allclose(out1, ref1, atol=1e-5, rtol=1e-5)

    # --- Test 2: ragged batch (multi-step grid + masked partial last block) ---
    N2 = 200
    x2 = jax.random.normal(kx2, (N2, D), dtype=jnp.float32)
    out2 = jax.block_until_ready(
        logistic_regression_forward(x2, gamma, beta, running_mean, running_var, weight, bias)
    )
    ref2 = _reference(x2, gamma, beta, running_mean, running_var, weight, bias)
    assert out2.shape == (N2, C)
    assert jnp.allclose(out2, ref2, atol=1e-5, rtol=1e-5)

    print("KERNEL_OK")
</pallas_src>

<mosaic_0001>
module attributes {stable_mosaic.version = 11 : i64} {
  func.func @_lr_kernel(%arg0: i32, %arg1: memref<8x32xf32, #tpu.memory_space<vmem>>, %arg2: memref<32x8xf32, #tpu.memory_space<vmem>>, %arg3: memref<1x8xf32, #tpu.memory_space<vmem>>, %arg4: memref<8x8xf32, #tpu.memory_space<vmem>>) attributes {dimension_semantics = [#tpu.dimension_semantics<parallel>], iteration_bounds = array<i64: 1>, scalar_prefetch = 0 : i64, scratch_operands = 0 : i64, tpu.core_type = #tpu.core_type<tc>, window_params = [{transform_indices = @transform_0, window_bounds = array<i64: 8, 32>}, {pipeline_mode = #tpu.pipeline_mode<synchronous>, transform_indices = @transform_1, window_bounds = array<i64: 32, 8>}, {pipeline_mode = #tpu.pipeline_mode<synchronous>, transform_indices = @transform_2, window_bounds = array<i64: 1, 8>}, {transform_indices = @transform_3, window_bounds = array<i64: 8, 8>}]} {
    %c0 = arith.constant 0 : index
    %c0_0 = arith.constant 0 : index
    %0 = vector.load %arg1[%c0, %c0_0] : memref<8x32xf32, #tpu.memory_space<vmem>>, vector<8x32xf32>
    %c0_1 = arith.constant 0 : index
    %c0_2 = arith.constant 0 : index
    %1 = vector.load %arg2[%c0_1, %c0_2] : memref<32x8xf32, #tpu.memory_space<vmem>>, vector<32x8xf32>
    %cst = arith.constant dense<0.000000e+00> : vector<8x8xf32>
    %2 = tpu.matmul %0, %1, %cst {dimension_numbers = #tpu.dot_dimension_numbers<[1], [0], [0], [1], [0, 0, 1, 1], [], []>} : vector<8x32xf32>, vector<32x8xf32>, vector<8x8xf32> -> vector<8x8xf32>
    %c0_3 = arith.constant 0 : index
    %c0_4 = arith.constant 0 : index
    %3 = vector.load %arg3[%c0_3, %c0_4] : memref<1x8xf32, #tpu.memory_space<vmem>>, vector<1x8xf32>
    %4 = vector.broadcast %3 : vector<1x8xf32> to vector<8x8xf32>
    %5 = arith.addf %2, %4 : vector<8x8xf32>
    %c0_5 = arith.constant 0 : index
    %c0_6 = arith.constant 0 : index
    %6 = vector.load %arg4[%c0_5, %c0_6] : memref<8x8xf32, #tpu.memory_space<vmem>>, vector<8x8xf32>
    tpu.vector_store %arg4[%c0_5, %c0_6], %5 {strides = array<i32>} : memref<8x8xf32, #tpu.memory_space<vmem>>, vector<8x8xf32>,
    return
  }
  func.func @transform_0(%arg0: i32) -> (i32, i32) {
    %c0_i32 = arith.constant 0 : i32
    %c0_i32_0 = arith.constant 0 : i32
    return %arg0, %c0_i32 : i32, i32
  }
  func.func @transform_1(%arg0: i32) -> (i32, i32) {
    %c0_i32 = arith.constant 0 : i32
    %c0_i32_0 = arith.constant 0 : i32
    %c0_i32_1 = arith.constant 0 : i32
    return %c0_i32, %c0_i32_0 : i32, i32
  }
  func.func @transform_2(%arg0: i32) -> (i32, i32) {
    %c0_i32 = arith.constant 0 : i32
    %c0_i32_0 = arith.constant 0 : i32
    %c0_i32_1 = arith.constant 0 : i32
    return %c0_i32, %c0_i32_0 : i32, i32
  }
  func.func @transform_3(%arg0: i32) -> (i32, i32) {
    %c0_i32 = arith.constant 0 : i32
    %c0_i32_0 = arith.constant 0 : i32
    return %arg0, %c0_i32 : i32, i32
  }
}

</mosaic_0001>

<llo_original>
// kernel: tpu_custom_call.1
$region0: #{tpu_custom_call.1}
  #allocation0 [shape = 'u32[]', space=smem, size = 0x4, offset = 0x4, fixed_abs, tag = 'smem constant byte address 0x4 - core index']
  #allocation1 [shape = 'u32[144,128]{1,0:T(1,128)}', space=vmem, size = 0x12000, scoped, tag = 'internal scratch']
  %s0 = inlined_call_operand.vmem [shape: f32[8,32], index: 0, kind: input, shape index: {}]
  %s1 = inlined_call_operand.vmem [shape: f32[32,8], index: 1, kind: input, shape index: {}]
  %s2 = inlined_call_operand.vmem [shape: f32[1,8], index: 2, kind: input, shape index: {}]
  %s3 = inlined_call_operand.hbm [shape: f32[8,8], index: 3, kind: output, shape index: {}]
  %s4 = sld [smem:[#allocation0]]
  $region22: #{tpu_custom_call.1} parent=0
    _
  %s6 = ssub.s32 1, %s4
  %s7 = scalar_select 0, %s6, %s4
  $region1: #{tpu_custom_call.1} parent=0
    #allocation2 [shape = 'u8[4096]{0}', space=vmem, size = 0x1000, scoped, tag = 'output window, operand 0, single buffered']
    #allocation3 [shape = 's32[1]{0}', space=sflag, size = 0x4, scoped, tag = 'scoped memory for tpu_custom_call.1']
    %8 = vsyncpa [#allocation3], 0
    // Predicated region
    $region2: #{tpu_custom_call.1} parent=1 // pred_check
      _
    $region3: #{tpu_custom_call.1} parent=1 // pred_check_branch
      %10 = sbr.rel (0) target = $region5
    $region4: #{tpu_custom_call.1} parent=1 // pred_region
      _
    $region5: #{tpu_custom_call.1} parent=1 // pred_fallthru
      _
    // Predicated region
    $region6: #{tpu_custom_call.1} parent=1 // pred_check
      _
    $region7: #{tpu_custom_call.1} parent=1 // pred_check_branch
      %12 = sbr.rel (0) target = $region9
    $region8: #{tpu_custom_call.1} parent=1 // pred_region
      _
    $region9: #{tpu_custom_call.1} parent=1 // pred_fallthru
      _
    // Predicated region
    $region10: #{tpu_custom_call.1} parent=1 // pred_check
      _
    $region11: #{tpu_custom_call.1} parent=1 // pred_check_branch
      %14 = sbr.rel (0) target = $region13
    $region12: #{tpu_custom_call.1} parent=1 // pred_region
      _
    $region13: #{tpu_custom_call.1} parent=1 // pred_fallthru
      _
    %v15 = vld [vmem:[%s0] sm:$0xff]
    %v16 = vld [vmem:[%s1] sm:$0xff]
    %v17 = vld [vmem:[%s1 + $0x8] sm:$0xff]
    %v18 = vld [vmem:[%s1 + $0x10] sm:$0xff]
    %v19 = vld [vmem:[%s1 + $0x18] sm:$0xff]
    %v20 = vld [vmem:[%s2] sm:$0x1]
    %v22 = vlaneseq
    %v23 = vshrl.u32 %v22, 7
    %v24 = vsub.s32 0, %v23
    %v25 = vrot.slane %v20, %v24
    %vm27 = vcmask 261120
    %v29 = vsel %vm27, %v15, 0
    %31 = vmatprep.subr.mxu0 0.0
    %32 = vmatpush1.msra.mxu0 0.0
    %33 = vmatprep.subr.mxu0 0.0
    %34 = vmatpush1.msra.mxu0 0.0
    %35 = vmatprep.subr.mxu0 0.0
    %36 = vmatpush1.msra.mxu0 0.0
    %37 = vmatprep.subr.mxu0 0.0
    %38 = vmatpush1.msra.mxu0 0.0
    %39 = vmatprep.subr.mxu0 0.0
    %40 = vmatpush1.msra.mxu0 0.0
    %41 = vmatprep.subr.mxu0 0.0
    %42 = vmatpush1.msra.mxu0 0.0
    %43 = vmatprep.subr.mxu0 0.0
    %44 = vmatpush1.msra.mxu0 0.0
    %45 = vmatprep.subr.mxu0 0.0
    %46 = vmatpush1.msra.mxu0 0.0
    %47 = vmatprep.subr.mxu0 0.0
    %48 = vmatpush1.msra.mxu0 0.0
    %49 = vmatprep.subr.mxu0 0.0
    %50 = vmatpush1.msra.mxu0 0.0
    %51 = vmatprep.subr.mxu0 0.0
    %52 = vmatpush1.msra.mxu0 0.0
    %53 = vmatprep.subr.mxu0 0.0
    %54 = vmatpush1.msra.mxu0 0.0
    %55 = vmatprep.subr.mxu0 0.0
    %56 = vmatpush1.msra.mxu0 %v19
    %57 = vmatprep.subr.mxu0 0.0
    %58 = vmatpush1.msra.mxu0 %v18
    %59 = vmatprep.subr.mxu0 0.0
    %60 = vmatpush1.msra.mxu0 %v17
    %61 = vmatprep.subr.mxu0 0.0
    %62 = vmatpush1.msra.mxu0 %v16
    %63 = vmatprep.subr.mxu0 0.0
    %64 = vmatpush2.msra.mxu0 0.0
    %65 = vmatprep.subr.mxu0 0.0
    %66 = vmatpush2.msra.mxu0 0.0
    %67 = vmatprep.subr.mxu0 0.0
    %68 = vmatpush2.msra.mxu0 0.0
    %69 = vmatprep.subr.mxu0 0.0
    %70 = vmatpush2.msra.mxu0 0.0
    %71 = vmatprep.subr.mxu0 0.0
    %72 = vmatpush2.msra.mxu0 0.0
    %73 = vmatprep.subr.mxu0 0.0
    %74 = vmatpush2.msra.mxu0 0.0
    %75 = vmatprep.subr.mxu0 0.0
    %76 = vmatpush2.msra.mxu0 0.0
    %77 = vmatprep.subr.mxu0 0.0
    %78 = vmatpush2.msra.mxu0 0.0
    %79 = vmatprep.subr.mxu0 0.0
    %80 = vmatpush2.msra.mxu0 0.0
    %81 = vmatprep.subr.mxu0 0.0
    %82 = vmatpush2.msra.mxu0 0.0
    %83 = vmatprep.subr.mxu0 0.0
    %84 = vmatpush2.msra.mxu0 0.0
    %85 = vmatprep.subr.mxu0 0.0
    %86 = vmatpush2.msra.mxu0 0.0
    %87 = vmatprep.subr.mxu0 0.0
    %88 = vmatpush2.msra.mxu0 0.0
    %89 = vmatprep.subr.mxu0 0.0
    %90 = vmatpush2.msra.mxu0 0.0
    %91 = vmatprep.subr.mxu0 0.0
    %92 = vmatpush2.msra.mxu0 0.0
    %93 = vmatprep.subr.mxu0 0.0
    %94 = vmatpush2.msra.mxu0 0.0
    %95 = vmatprep.mubr.f32.mxu0 0.0
    %96 = vmatmul.mubr.f32.gmra.mxu0 %v29
    %v97 = vpop.f32.mrf.mxu0
    %v98 = vadd.f32 %v25, %v97
    %v99 = vpop.f32.mrf.mxu0
    %100 = vdwg.mxu0
    %vm101 = vcmask 64512
    %102 = vst.msk [vmem:[#allocation2] sm:$0xff] %vm101, %v98
    // Predicated region
    $region14: #{tpu_custom_call.1} parent=1 // pred_check
      _
    $region15: #{tpu_custom_call.1} parent=1 // pred_check_branch
      %104 = sbr.rel (0) target = $region17
    $region16: #{tpu_custom_call.1} parent=1 // pred_region
      %s106 = ssub.s32 128, 128
      %107 = vsyncadd [#allocation3], %s106
      %s109 = sshll.u32 [#allocation2], 4
      %s110 = int_to_ptr.vmem [resolvable:$true] %s109
      %112 = dma.vmem_to_hbm [thread:$0]  %s110, 128, %s3, [#allocation3]
    $region17: #{tpu_custom_call.1} parent=1 // pred_fallthru
      _
    // Predicated region
    $region18: #{tpu_custom_call.1} parent=1 // pred_check
      _
    $region19: #{tpu_custom_call.1} parent=1 // pred_check_branch
      %114 = sbr.rel (0) target = $region21
    $region20: #{tpu_custom_call.1} parent=1 // pred_region
      %115 = dma.done [#allocation3], 128
    $region21: #{tpu_custom_call.1} parent=1 // pred_fallthru
      _
    %116 = vsyncpa [#allocation3], 1

</llo_original>
